<compile_context>
chip_gen: v7x
topology: tpu7x:2x2x1
jax: 0.10.0
libtpu: 0.0.40
codegen_flags: <defaults>
</compile_context>

<pallas_src>
import functools
import math

import jax
import jax.numpy as jnp
from jax.experimental import pallas as pl
from jax.experimental.pallas import tpu as pltpu


def _conv_bn_silu_kernel(x_ref, w_ref, b_ref, m_ref, o_ref, *, taps, shifts):
    """One (image, Cout-tile) pair per grid step.

    x_ref: (1, Cin, HWp)          flat input slab, spatial on lanes (compute dtype)
    w_ref: (Cout_blk, taps*Cin)   BN-scale-folded weights, im2col row order (compute dtype)
    b_ref: (Cout_blk, 1)          folded BN bias (fp32)
    m_ref: (taps, 1, HWp)         per-tap 0/1 boundary masks (compute dtype)
    o_ref: (1, Cout_blk, HWp)     flat output slab (lane dense)
    """
    x = x_ref[0]                                                     # (Cin, HWp)

    # Build the im2col matrix in VMEM: one lane rotation (XLU) + mask multiply per tap.
    # shift == 0 <=> center tap, which never needs masking (its neighbor is itself).
    parts = []
    for t in range(taps):                                            # static unroll
        if shifts[t] == 0:
            parts.append(x)
        else:
            parts.append(pltpu.roll(x, shifts[t], 1) * m_ref[t])
    xcol = parts[0] if taps == 1 else jnp.concatenate(parts, axis=0)  # (taps*Cin, HWp)

    # Single deep-K MXU matmul with fp32 accumulation; BN bias as one broadcast add.
    acc = jnp.dot(w_ref[...], xcol, preferred_element_type=jnp.float32)
    acc = acc + b_ref[...]
    y = acc * jax.nn.sigmoid(acc)                                    # SiLU (sigmoid on EUP)
    o_ref[0] = y.astype(o_ref.dtype)


def _cout_tile(c2, n_images):
    """Output-channel tile: 256/128 for big layers, full c2 otherwise.

    TODO(synk): per-generation choice (128 on v5e, 256 on v6e/v7x) via device query.
    """
    if c2 >= 256 and c2 % 256 == 0:
        blk = 256
    elif c2 >= 128 and c2 % 128 == 0:
        blk = 128
    else:
        blk = c2
    # Batch-1 layer with a single Cout tile -> split so 2-TC chips get >=2 parallel steps.
    if n_images == 1 and c2 // blk == 1 and blk >= 256 and blk % 128 == 0:
        blk //= 2
    return blk


def _physical_vmem_bytes():
    try:
        info = pltpu.get_tpu_info()
        return int(getattr(info, "vmem_capacity_bytes", 64 * 1024 * 1024))
    except Exception:
        return 64 * 1024 * 1024          # conservative (v7x per-TC) fallback


def conv_bn_silu(x_nchw, w_oihw, gamma, beta, running_mean, running_var, *,
                 stride=1, padding=None, dilation=1, groups=1, eps=1e-5,
                 compute_dtype=jnp.bfloat16):
    """ultralytics Conv.forward(x) = SiLU(BN(Conv2d(x)))  (inference-mode BN)."""
    assert stride == 1 and dilation == 1 and groups == 1, "only s=1, g=1, d=1 supported"
    c2, c1, kh, kw = w_oihw.shape
    if padding is None:                                   # autopad('same')
        ph, pw = kh // 2, kw // 2
    elif isinstance(padding, (tuple, list)):
        ph, pw = int(padding[0]), int(padding[1])
    else:
        ph = pw = int(padding)
    assert kh == 2 * ph + 1 and kw == 2 * pw + 1, "only odd-k 'same' Conv supported"
    N, C, H, W = x_nchw.shape
    assert C == c1
    HW = H * W
    HWp = ((HW + 127) // 128) * 128                       # lane-dense spatial length
    taps = kh * kw
    out_dtype = x_nchw.dtype

    # ---- plain-JAX glue: BN folding + weight/mask prep (no transposes of x) --------
    scale = (gamma / jnp.sqrt(running_var + eps)).astype(jnp.float32)            # (c2,)
    bias = (beta.astype(jnp.float32)
            - running_mean.astype(jnp.float32) * scale).reshape(c2, 1)           # fp32

    # OIHW -> (Cout, taps*Cin) with BN scale folded in, matching the im2col row order
    # (row t*Cin + i  <->  tap t = dh*kw + dw, input channel i).
    w_flat = jnp.transpose(w_oihw, (0, 2, 3, 1)).reshape(c2, taps * c1)
    w_flat = (w_flat.astype(jnp.float32) * scale.reshape(c2, 1)).astype(compute_dtype)

    # Flat (N, Cin, HWp) activations: free reshape of NCHW + zero pad to 128-lane multiple.
    x = x_nchw.reshape(N, c1, HW).astype(compute_dtype)
    if HWp != HW:
        x = jnp.pad(x, ((0, 0), (0, 0), (0, HWp - HW)))

    # Per-tap lane shift + boundary-validity mask (replaces zero padding; also zeroes
    # roll wrap-around and HWp-pad contributions).  Masks shipped in the compute dtype.
    hh = jnp.arange(HWp, dtype=jnp.int32) // W
    ww = jnp.arange(HWp, dtype=jnp.int32) % W
    shifts, masks = [], []
    for dh in range(kh):
        for dw in range(kw):
            oh, ow = dh - ph, dw - pw
            shifts.append(int((-(oh * W + ow)) % HWp))
            masks.append((hh + oh >= 0) & (hh + oh < H) & (ww + ow >= 0) & (ww + ow < W))
    mask = jnp.stack(masks).astype(compute_dtype).reshape(taps, 1, HWp)

    co_blk = _cout_tile(c2, N)
    n_co = c2 // co_blk

    # ---- grid order: keep the larger repeatedly-reused operand VMEM-resident -------
    cb = jnp.dtype(compute_dtype).itemsize
    ob = jnp.dtype(out_dtype).itemsize
    x_img_bytes = c1 * HWp * cb
    w_bytes = c2 * taps * c1 * cb
    # HBM read traffic: (n outer, co inner) = N*x + N*w ; (co outer, n inner) = n_co*N*x + w
    weight_resident = (N * x_img_bytes + N * w_bytes) > (n_co * N * x_img_bytes + w_bytes)
    if weight_resident:
        grid = (n_co, N)
        x_map = lambda co, n: (n, 0, 0)
        w_map = lambda co, n: (co, 0)
        b_map = lambda co, n: (co, 0)
        m_map = lambda co, n: (0, 0, 0)
        o_map = lambda co, n: (n, co, 0)
    else:
        grid = (N, n_co)
        x_map = lambda n, co: (n, 0, 0)
        w_map = lambda n, co: (co, 0)
        b_map = lambda n, co: (co, 0)
        m_map = lambda n, co: (0, 0, 0)
        o_map = lambda n, co: (n, co, 0)

    # ---- VMEM budget: double-buffered blocks + in-kernel temporaries ---------------
    block_bytes = 2 * (c1 * HWp * cb                   # x slab
                       + co_blk * taps * c1 * cb       # folded weights
                       + co_blk * 4                    # folded bias
                       + taps * HWp * cb               # tap masks
                       + co_blk * HWp * ob)            # output slab
    temp_bytes = (2 * taps * c1 * HWp * cb             # rolled parts + im2col copy
                  + 2 * co_blk * HWp * 4)              # fp32 accumulator + SiLU temp
    cap = (3 * _physical_vmem_bytes()) // 4            # ~48 MiB on v7x, ~96 MiB on v5e/v6e
    vmem_limit = int(min(max(block_bytes + temp_bytes + (8 << 20), 32 << 20), cap))

    out_flat = pl.pallas_call(
        functools.partial(_conv_bn_silu_kernel, taps=taps, shifts=tuple(shifts)),
        out_shape=jax.ShapeDtypeStruct((N, c2, HWp), out_dtype),
        grid_spec=pltpu.PrefetchScalarGridSpec(
            num_scalar_prefetch=0,
            grid=grid,
            in_specs=[
                pl.BlockSpec((1, c1, HWp), x_map),              # x slab
                pl.BlockSpec((co_blk, taps * c1), w_map),       # folded weights
                pl.BlockSpec((co_blk, 1), b_map),               # folded bias
                pl.BlockSpec((taps, 1, HWp), m_map),            # tap masks
            ],
            out_specs=pl.BlockSpec((1, co_blk, HWp), o_map),
        ),
        compiler_params=pltpu.CompilerParams(
            dimension_semantics=("parallel", "parallel"),
            vmem_limit_bytes=vmem_limit,
        ),
    )(x, w_flat, bias, mask)

    # Output is already in NCHW order — slice off lane padding, reshape is free.
    out = out_flat[:, :, :HW] if HWp != HW else out_flat
    return out.reshape(N, c2, H, W)


def _reference(x_nchw, w_oihw, gamma, beta, running_mean, running_var, ph, pw, eps=1e-5):
    """Pure-JAX reference of the same forward pass (for correctness check)."""
    y = jax.lax.conv_general_dilated(
        x_nchw, w_oihw, window_strides=(1, 1), padding=((ph, ph), (pw, pw)),
        dimension_numbers=("NCHW", "OIHW", "NCHW"))
    scale = (gamma / jnp.sqrt(running_var + eps)).reshape(1, -1, 1, 1)
    bias = (beta - running_mean * gamma / jnp.sqrt(running_var + eps)).reshape(1, -1, 1, 1)
    z = y * scale + bias
    return z * jax.nn.sigmoid(z)


if __name__ == "__main__":
    # Module config: Conv(c1=4, c2=8, k=3, s=1)  ->  autopad gives p=1
    c1, c2, k = 4, 8, 3
    N, H, W = 2, 16, 16

    key = jax.random.PRNGKey(0)
    kx, kw_, kg, kb, km, kv, kx2 = jax.random.split(key, 7)

    x = jax.random.normal(kx, (N, c1, H, W), dtype=jnp.float32)
    w_oihw = jax.random.normal(kw_, (c2, c1, k, k), dtype=jnp.float32) * 0.1
    gamma = 1.0 + 0.1 * jax.random.normal(kg, (c2,), dtype=jnp.float32)
    beta = 0.1 * jax.random.normal(kb, (c2,), dtype=jnp.float32)
    running_mean = 0.1 * jax.random.normal(km, (c2,), dtype=jnp.float32)
    running_var = jnp.abs(jax.random.normal(kv, (c2,), dtype=jnp.float32)) + 0.5

    ref = _reference(x, w_oihw, gamma, beta, running_mean, running_var, ph=k // 2, pw=k // 2)

    # Exact path (fp32 compute) — tight tolerance.
    out_f32 = conv_bn_silu(x, w_oihw, gamma, beta, running_mean, running_var,
                           compute_dtype=jnp.float32)
    out_f32 = jax.block_until_ready(out_f32)
    assert out_f32.shape == (N, c2, H, W)
    assert jnp.allclose(out_f32, ref, atol=1e-4, rtol=1e-4), "fp32 path mismatch vs reference"

    # Default bf16 MXU path (fp32 accumulation) — bf16-level tolerance.
    out_bf16 = conv_bn_silu(x, w_oihw, gamma, beta, running_mean, running_var)
    out_bf16 = jax.block_until_ready(out_bf16)
    assert out_bf16.shape == (N, c2, H, W)
    assert jnp.allclose(out_bf16, ref, atol=4e-2, rtol=4e-2), "bf16 path mismatch vs reference"

    # 1x1 conv (the module's default k=1) exercises the single-tap (no roll/mask) path.
    w1 = jax.random.normal(kw_, (c2, c1, 1, 1), dtype=jnp.float32) * 0.1
    ref1 = _reference(x, w1, gamma, beta, running_mean, running_var, ph=0, pw=0)
    out1 = jax.block_until_ready(
        conv_bn_silu(x, w1, gamma, beta, running_mean, running_var,
                     compute_dtype=jnp.float32))
    assert jnp.allclose(out1, ref1, atol=1e-4, rtol=1e-4), "k=1 path mismatch vs reference"

    # Non-128-aligned spatial size (13x13 -> HW=169 padded to 256) exercises lane padding.
    x13 = jax.random.normal(kx2, (N, c1, 13, 13), dtype=jnp.float32)
    ref13 = _reference(x13, w_oihw, gamma, beta, running_mean, running_var, ph=1, pw=1)
    out13 = jax.block_until_ready(
        conv_bn_silu(x13, w_oihw, gamma, beta, running_mean, running_var,
                     compute_dtype=jnp.float32))
    assert jnp.allclose(out13, ref13, atol=1e-4, rtol=1e-4), "13x13 padded path mismatch"

    print("KERNEL_OK")
</pallas_src>

<mosaic_0001>
module attributes {stable_mosaic.version = 11 : i64} {
  func.func @_conv_bn_silu_kernel(%arg0: i32, %arg1: i32, %arg2: memref<1x4x256xf32, #tpu.memory_space<vmem>>, %arg3: memref<8x36xf32, #tpu.memory_space<vmem>>, %arg4: memref<8x1xf32, #tpu.memory_space<vmem>>, %arg5: memref<9x1x256xf32, #tpu.memory_space<vmem>>, %arg6: memref<1x8x256xf32, #tpu.memory_space<vmem>>) attributes {dimension_semantics = [#tpu.dimension_semantics<parallel>, #tpu.dimension_semantics<parallel>], iteration_bounds = array<i64: 1, 2>, scalar_prefetch = 0 : i64, scratch_operands = 0 : i64, tpu.core_type = #tpu.core_type<tc>, window_params = [{transform_indices = @transform_0, window_bounds = array<i64: 1, 4, 256>}, {transform_indices = @transform_1, window_bounds = array<i64: 8, 36>}, {transform_indices = @transform_2, window_bounds = array<i64: 8, 1>}, {pipeline_mode = #tpu.pipeline_mode<synchronous>, transform_indices = @transform_3, window_bounds = array<i64: 9, 1, 256>}, {transform_indices = @transform_4, window_bounds = array<i64: 1, 8, 256>}]} {
    %c0 = arith.constant 0 : index
    %c0_0 = arith.constant 0 : index
    %c0_1 = arith.constant 0 : index
    %0 = vector.load %arg2[%c0, %c0_0, %c0_1] : memref<1x4x256xf32, #tpu.memory_space<vmem>>, vector<1x4x256xf32>
    %1 = vector.shape_cast %0 : vector<1x4x256xf32> to vector<4x256xf32>
    %c17_i32 = arith.constant 17 : i32
    %2 = tpu.dynamic_rotate %1 by %c17_i32 dim 1 : vector<4x256xf32>, i32 -> vector<4x256xf32>
    %c0_2 = arith.constant 0 : index
    %c0_3 = arith.constant 0 : index
    %c0_4 = arith.constant 0 : index
    %3 = vector.load %arg5[%c0_2, %c0_3, %c0_4] : memref<9x1x256xf32, #tpu.memory_space<vmem>>, vector<1x1x256xf32>
    %4 = vector.shape_cast %3 : vector<1x1x256xf32> to vector<1x256xf32>
    %5 = vector.broadcast %4 : vector<1x256xf32> to vector<4x256xf32>
    %6 = arith.mulf %2, %5 : vector<4x256xf32>
    %c16_i32 = arith.constant 16 : i32
    %7 = tpu.dynamic_rotate %1 by %c16_i32 dim 1 : vector<4x256xf32>, i32 -> vector<4x256xf32>
    %c1 = arith.constant 1 : index
    %c0_5 = arith.constant 0 : index
    %c0_6 = arith.constant 0 : index
    %8 = vector.load %arg5[%c1, %c0_5, %c0_6] : memref<9x1x256xf32, #tpu.memory_space<vmem>>, vector<1x1x256xf32>
    %9 = vector.shape_cast %8 : vector<1x1x256xf32> to vector<1x256xf32>
    %10 = vector.broadcast %9 : vector<1x256xf32> to vector<4x256xf32>
    %11 = arith.mulf %7, %10 : vector<4x256xf32>
    %c15_i32 = arith.constant 15 : i32
    %12 = tpu.dynamic_rotate %1 by %c15_i32 dim 1 : vector<4x256xf32>, i32 -> vector<4x256xf32>
    %c2 = arith.constant 2 : index
    %c0_7 = arith.constant 0 : index
    %c0_8 = arith.constant 0 : index
    %13 = vector.load %arg5[%c2, %c0_7, %c0_8] : memref<9x1x256xf32, #tpu.memory_space<vmem>>, vector<1x1x256xf32>
    %14 = vector.shape_cast %13 : vector<1x1x256xf32> to vector<1x256xf32>
    %15 = vector.broadcast %14 : vector<1x256xf32> to vector<4x256xf32>
    %16 = arith.mulf %12, %15 : vector<4x256xf32>
    %c1_i32 = arith.constant 1 : i32
    %17 = tpu.dynamic_rotate %1 by %c1_i32 dim 1 : vector<4x256xf32>, i32 -> vector<4x256xf32>
    %c3 = arith.constant 3 : index
    %c0_9 = arith.constant 0 : index
    %c0_10 = arith.constant 0 : index
    %18 = vector.load %arg5[%c3, %c0_9, %c0_10] : memref<9x1x256xf32, #tpu.memory_space<vmem>>, vector<1x1x256xf32>
    %19 = vector.shape_cast %18 : vector<1x1x256xf32> to vector<1x256xf32>
    %20 = vector.broadcast %19 : vector<1x256xf32> to vector<4x256xf32>
    %21 = arith.mulf %17, %20 : vector<4x256xf32>
    %c255_i32 = arith.constant 255 : i32
    %22 = tpu.dynamic_rotate %1 by %c255_i32 dim 1 : vector<4x256xf32>, i32 -> vector<4x256xf32>
    %c5 = arith.constant 5 : index
    %c0_11 = arith.constant 0 : index
    %c0_12 = arith.constant 0 : index
    %23 = vector.load %arg5[%c5, %c0_11, %c0_12] : memref<9x1x256xf32, #tpu.memory_space<vmem>>, vector<1x1x256xf32>
    %24 = vector.shape_cast %23 : vector<1x1x256xf32> to vector<1x256xf32>
    %25 = vector.broadcast %24 : vector<1x256xf32> to vector<4x256xf32>
    %26 = arith.mulf %22, %25 : vector<4x256xf32>
    %c241_i32 = arith.constant 241 : i32
    %27 = tpu.dynamic_rotate %1 by %c241_i32 dim 1 : vector<4x256xf32>, i32 -> vector<4x256xf32>
    %c6 = arith.constant 6 : index
    %c0_13 = arith.constant 0 : index
    %c0_14 = arith.constant 0 : index
    %28 = vector.load %arg5[%c6, %c0_13, %c0_14] : memref<9x1x256xf32, #tpu.memory_space<vmem>>, vector<1x1x256xf32>
    %29 = vector.shape_cast %28 : vector<1x1x256xf32> to vector<1x256xf32>
    %30 = vector.broadcast %29 : vector<1x256xf32> to vector<4x256xf32>
    %31 = arith.mulf %27, %30 : vector<4x256xf32>
    %c240_i32 = arith.constant 240 : i32
    %32 = tpu.dynamic_rotate %1 by %c240_i32 dim 1 : vector<4x256xf32>, i32 -> vector<4x256xf32>
    %c7 = arith.constant 7 : index
    %c0_15 = arith.constant 0 : index
    %c0_16 = arith.constant 0 : index
    %33 = vector.load %arg5[%c7, %c0_15, %c0_16] : memref<9x1x256xf32, #tpu.memory_space<vmem>>, vector<1x1x256xf32>
    %34 = vector.shape_cast %33 : vector<1x1x256xf32> to vector<1x256xf32>
    %35 = vector.broadcast %34 : vector<1x256xf32> to vector<4x256xf32>
    %36 = arith.mulf %32, %35 : vector<4x256xf32>
    %c239_i32 = arith.constant 239 : i32
    %37 = tpu.dynamic_rotate %1 by %c239_i32 dim 1 : vector<4x256xf32>, i32 -> vector<4x256xf32>
    %c8 = arith.constant 8 : index
    %c0_17 = arith.constant 0 : index
    %c0_18 = arith.constant 0 : index
    %38 = vector.load %arg5[%c8, %c0_17, %c0_18] : memref<9x1x256xf32, #tpu.memory_space<vmem>>, vector<1x1x256xf32>
    %39 = vector.shape_cast %38 : vector<1x1x256xf32> to vector<1x256xf32>
    %40 = vector.broadcast %39 : vector<1x256xf32> to vector<4x256xf32>
    %41 = arith.mulf %37, %40 : vector<4x256xf32>
    %42 = tpu.concatenate %6, %11, %16, %21, %1, %26, %31, %36, %41 in 0 : vector<4x256xf32>, vector<4x256xf32>, vector<4x256xf32>, vector<4x256xf32>, vector<4x256xf32>, vector<4x256xf32>, vector<4x256xf32>, vector<4x256xf32>, vector<4x256xf32> -> vector<36x256xf32>
    %c0_19 = arith.constant 0 : index
    %c0_20 = arith.constant 0 : index
    %43 = vector.load %arg3[%c0_19, %c0_20] : memref<8x36xf32, #tpu.memory_space<vmem>>, vector<8x36xf32>
    %cst = arith.constant dense<0.000000e+00> : vector<8x256xf32>
    %44 = tpu.matmul %43, %42, %cst {dimension_numbers = #tpu.dot_dimension_numbers<[1], [0], [0], [1], [0, 0, 1, 1], [], []>} : vector<8x36xf32>, vector<36x256xf32>, vector<8x256xf32> -> vector<8x256xf32>
    %c0_21 = arith.constant 0 : index
    %c0_22 = arith.constant 0 : index
    %45 = vector.load %arg4[%c0_21, %c0_22] : memref<8x1xf32, #tpu.memory_space<vmem>>, vector<8x1xf32>
    %46 = vector.broadcast %45 : vector<8x1xf32> to vector<8x256xf32>
    %47 = arith.addf %44, %46 : vector<8x256xf32>
    %48 = arith.negf %47 : vector<8x256xf32>
    %49 = math.exp %48 : vector<8x256xf32>
    %cst_23 = arith.constant 1.000000e+00 : f32
    %50 = vector.broadcast %cst_23 : f32 to vector<8x256xf32>
    %51 = arith.addf %50, %49 : vector<8x256xf32>
    %52 = arith.divf %50, %51 : vector<8x256xf32>
    %53 = arith.mulf %47, %52 : vector<8x256xf32>
    %c0_24 = arith.constant 0 : index
    %c0_25 = arith.constant 0 : index
    %c0_26 = arith.constant 0 : index
    %54 = vector.load %arg6[%c0_24, %c0_25, %c0_26] : memref<1x8x256xf32, #tpu.memory_space<vmem>>, vector<1x8x256xf32>
    %55 = vector.shape_cast %54 : vector<1x8x256xf32> to vector<8x256xf32>
    %56 = vector.shape_cast %53 : vector<8x256xf32> to vector<1x8x256xf32>
    tpu.vector_store %arg6[%c0_24, %c0_25, %c0_26], %56 {strides = array<i32>} : memref<1x8x256xf32, #tpu.memory_space<vmem>>, vector<1x8x256xf32>,
    return
  }
  func.func @transform_0(%arg0: i32, %arg1: i32) -> (i32, i32, i32) {
    %c0_i32 = arith.constant 0 : i32
    %c0_i32_0 = arith.constant 0 : i32
    %c0_i32_1 = arith.constant 0 : i32
    return %arg1, %c0_i32, %c0_i32_0 : i32, i32, i32
  }
  func.func @transform_1(%arg0: i32, %arg1: i32) -> (i32, i32) {
    %c0_i32 = arith.constant 0 : i32
    %c0_i32_0 = arith.constant 0 : i32
    return %arg0, %c0_i32 : i32, i32
  }
  func.func @transform_2(%arg0: i32, %arg1: i32) -> (i32, i32) {
    %c0_i32 = arith.constant 0 : i32
    %c0_i32_0 = arith.constant 0 : i32
    return %arg0, %c0_i32 : i32, i32
  }
  func.func @transform_3(%arg0: i32, %arg1: i32) -> (i32, i32, i32) {
    %c0_i32 = arith.constant 0 : i32
    %c0_i32_0 = arith.constant 0 : i32
    %c0_i32_1 = arith.constant 0 : i32
    %c0_i32_2 = arith.constant 0 : i32
    return %c0_i32, %c0_i32_0, %c0_i32_1 : i32, i32, i32
  }
  func.func @transform_4(%arg0: i32, %arg1: i32) -> (i32, i32, i32) {
    %c0_i32 = arith.constant 0 : i32
    %c0_i32_0 = arith.constant 0 : i32
    return %arg1, %arg0, %c0_i32 : i32, i32, i32
  }
}

</mosaic_0001>

<llo_original>
// kernel: tpu_custom_call.1
$region0: #{tpu_custom_call.1}
  #allocation0 [shape = 'u32[]', space=smem, size = 0x4, offset = 0x4, fixed_abs, tag = 'smem constant byte address 0x4 - core index']
  #allocation1 [shape = 'u32[144,128]{1,0:T(1,128)}', space=vmem, size = 0x12000, scoped, tag = 'internal scratch']
  %s0 = inlined_call_operand.hbm [shape: f32[2,4,256], index: 0, kind: input, shape index: {}]
  %s1 = inlined_call_operand.hbm [shape: f32[8,36], index: 1, kind: input, shape index: {}]
  %s2 = inlined_call_operand.vmem [shape: f32[8,1], index: 2, kind: input, shape index: {}]
  %s3 = inlined_call_operand.vmem [shape: f32[9,1,256], index: 3, kind: input, shape index: {}]
  %s4 = inlined_call_operand.hbm [shape: f32[2,8,256], index: 4, kind: output, shape index: {}]
  %s5 = sld [smem:[#allocation0]]
  $region57: #{tpu_custom_call.1} parent=0
    _
  %s7 = ssub.s32 1, %s5
  %s8 = scalar_select 0, %s7, %s5
  $region1: #{tpu_custom_call.1} parent=0
    #allocation2 [shape = 'u8[8192]{0}', space=vmem, size = 0x2000, scoped, tag = 'input window, operand 0']
    #allocation3 [shape = 's32[2]{0}', space=sflag, size = 0x8, scoped, tag = 'scoped memory for tpu_custom_call.1']
    #allocation4 [shape = 's32[2]{0}', space=sflag, size = 0x8, scoped, tag = 'scoped memory for tpu_custom_call.1']
    #allocation5 [shape = 'u8[4096]{0}', space=vmem, size = 0x1000, scoped, tag = 'input window, operand 1, single buffered']
    #allocation6 [shape = 's32[1]{0}', space=sflag, size = 0x4, scoped, tag = 'scoped memory for tpu_custom_call.1']
    #allocation7 [shape = 'u8[16384]{0}', space=vmem, size = 0x4000, scoped, tag = 'output window, operand 0']
    %9 = vsyncpa [#allocation3], 0
    %s10 = scalar_lea.sflag [#allocation3], 1
    %11 = vsyncpa %s10, 0
    %12 = vsyncpa [#allocation6], 0
    %13 = vsyncpa [#allocation4], 0
    %s14 = scalar_lea.sflag [#allocation4], 1
    %15 = vsyncpa %s14, 0
    loop: start=0, step=1, limit=4
    $region2: #{tpu_custom_call.1} parent=1 // loop_pre_header
      _
    $region3: #{tpu_custom_call.1} parent=1 // loop_header
      %s17 = sphi 0, %s21
      %p18 = scmp.ge.s32.totalorder %s17, 4
      %s24 = sphi 0, %s36
      %s25 = sphi 0, %s32
      %s26 = sphi 0, %s24
      %s27 = sphi 0, %s25
      %s28 = sphi 0, %s26
      %s29 = sphi 0, %s27
      %s39 = sphi 0, %s41
      %s42 = sphi 0, %s39
      %s43 = sphi 0, %s42
      %s59 = sphi 0, %s43
      %s65 = sphi 0, %s67
      %s68 = sphi 0, %s65
      %s69 = sphi 0, %s68
      %s85 = sphi 0, %s69
      %s91 = sphi 0, %s93
      %s94 = sphi 0, %s91
      %s95 = sphi 0, %s94
      %s111 = sphi 0, %s95
      %s115 = sphi 0, %s115
      %s117 = sphi 0, %s115
      %s118 = sphi 0, %s117
      %s132 = sphi 0, %s118
      %s140 = sphi 0, %s142
      %s143 = sphi 0, %s140
      %s144 = sphi 0, %s143
      %s160 = sphi 0, %s144
    $region4: #{tpu_custom_call.1} parent=1 // loop_header_branch
      %20 = sbr.rel (%p18) target = $region8
    $region5: #{tpu_custom_call.1} parent=1 // loop_body
      %s22 = ssub.s32 %s17, 1
      %s23 = ssub.s32 %s17, 2
      %s30 = sadd.s32 1, %s25
      %p31 = scmp.ge.s32.totalorder %s30, 2
      %s32 = scalar_select %p31, 0, %s30
      %s33 = sadd.s32 1, %s24
      %s34 = scalar_select %p31, %s33, %s24
      %p35 = scmp.ge.s32.totalorder %s34, 1
      %s36 = scalar_select %p35, 0, %s34
      %s37 = ssub.s32 %s25, %s32
      %p38 = scmp.eq.s32.totalorder %s37, 0
      %s40 = sadd.s32 %s39, 1
      %s41 = scalar_select %p38, %s39, %s40
      %p44 = pneg %p38
      %p45 = scmp.eq.s32.totalorder %s17, 1
      %p46 = por %p44, %p45
      %p47 = scmp.ne.s32.totalorder %s39, %s42
      %p48 = scmp.eq.s32.totalorder %s17, 0
      %p49 = por %p47, %p48
      %p50 = scmp.ne.s32.totalorder %s39, %s42
      %p51 = scmp.eq.s32.totalorder %s22, 1
      %p52 = por %p50, %p51
      %p53 = scmp.ne.s32.totalorder %s42, %s43
      %p54 = scmp.eq.s32.totalorder %s22, 0
      %p55 = por %p53, %p54
      %p56 = scmp.ne.s32.totalorder %s42, %s43
      %p57 = scmp.eq.s32.totalorder %s23, 1
      %p58 = por %p56, %p57
      %p60 = scmp.ne.s32.totalorder %s43, %s59
      %p61 = scmp.eq.s32.totalorder %s23, 0
      %p62 = por %p60, %p61
      %s63 = ssub.s32 %s24, %s36
      %p64 = scmp.eq.s32.totalorder %s63, 0
      %s66 = sadd.s32 %s65, 1
      %s67 = scalar_select %p64, %s65, %s66
      %p70 = pneg %p64
      %p71 = scmp.eq.s32.totalorder %s17, 1
      %p72 = por %p70, %p71
      %p73 = scmp.ne.s32.totalorder %s65, %s68
      %p74 = scmp.eq.s32.totalorder %s17, 0
      %p75 = por %p73, %p74
      %p76 = scmp.ne.s32.totalorder %s65, %s68
      %p77 = scmp.eq.s32.totalorder %s22, 1
      %p78 = por %p76, %p77
      %p79 = scmp.ne.s32.totalorder %s68, %s69
      %p80 = scmp.eq.s32.totalorder %s22, 0
      %p81 = por %p79, %p80
      %p82 = scmp.ne.s32.totalorder %s68, %s69
      %p83 = scmp.eq.s32.totalorder %s23, 1
      %p84 = por %p82, %p83
      %p86 = scmp.ne.s32.totalorder %s69, %s85
      %p87 = scmp.eq.s32.totalorder %s23, 0
      %p88 = por %p86, %p87
      %s89 = ssub.s32 %s24, %s36
      %p90 = scmp.eq.s32.totalorder %s89, 0
      %s92 = sadd.s32 %s91, 1
      %s93 = scalar_select %p90, %s91, %s92
      %p96 = pneg %p90
      %p97 = scmp.eq.s32.totalorder %s17, 1
      %p98 = por %p96, %p97
      %p99 = scmp.ne.s32.totalorder %s91, %s94
      %p100 = scmp.eq.s32.totalorder %s17, 0
      %p101 = por %p99, %p100
      %p102 = scmp.ne.s32.totalorder %s91, %s94
      %p103 = scmp.eq.s32.totalorder %s22, 1
      %p104 = por %p102, %p103
      %p105 = scmp.ne.s32.totalorder %s94, %s95
      %p106 = scmp.eq.s32.totalorder %s22, 0
      %p107 = por %p105, %p106
      %p108 = scmp.ne.s32.totalorder %s94, %s95
      %p109 = scmp.eq.s32.totalorder %s23, 1
      %p110 = por %p108, %p109
      %p112 = scmp.ne.s32.totalorder %s95, %s111
      %p113 = scmp.eq.s32.totalorder %s23, 0
      %p114 = por %p112, %p113
      %s116 = sadd.s32 %s115, 1
      %p119 = scmp.eq.s32.totalorder %s17, 1
      %p120 = scmp.ne.s32.totalorder %s115, %s117
      %p121 = scmp.eq.s32.totalorder %s17, 0
      %p122 = por %p120, %p121
      %p123 = scmp.ne.s32.totalorder %s115, %s117
      %p124 = scmp.eq.s32.totalorder %s22, 1
      %p125 = por %p123, %p124
      %p126 = scmp.ne.s32.totalorder %s117, %s118
      %p127 = scmp.eq.s32.totalorder %s22, 0
      %p128 = por %p126, %p127
      %p129 = scmp.ne.s32.totalorder %s117, %s118
      %p130 = scmp.eq.s32.totalorder %s23, 1
      %p131 = por %p129, %p130
      %p133 = scmp.ne.s32.totalorder %s118, %s132
      %p134 = scmp.eq.s32.totalorder %s23, 0
      %p135 = por %p133, %p134
      %s136 = ssub.s32 %s25, %s32
      %s137 = ssub.s32 %s24, %s36
      %s138 = sor.u32 %s136, %s137
      %p139 = scmp.eq.s32.totalorder %s138, 0
      %s141 = sadd.s32 %s140, 1
      %s142 = scalar_select %p139, %s140, %s141
      %p145 = pneg %p139
      %p146 = scmp.eq.s32.totalorder %s17, 1
      %p147 = por %p145, %p146
      %p148 = scmp.ne.s32.totalorder %s140, %s143
      %p149 = scmp.eq.s32.totalorder %s17, 0
      %p150 = por %p148, %p149
      %p151 = scmp.ne.s32.totalorder %s140, %s143
      %p152 = scmp.eq.s32.totalorder %s22, 1
      %p153 = por %p151, %p152
      %p154 = scmp.ne.s32.totalorder %s143, %s144
      %p155 = scmp.eq.s32.totalorder %s22, 0
      %p156 = por %p154, %p155
      %p157 = scmp.ne.s32.totalorder %s143, %s144
      %p158 = scmp.eq.s32.totalorder %s23, 1
      %p159 = por %p157, %p158
      %p161 = scmp.ne.s32.totalorder %s144, %s160
      %p162 = scmp.eq.s32.totalorder %s23, 0
      %p163 = por %p161, %p162
      %p164 = scmp.le.s32.totalorder 1, %s17
      %p165 = scmp.lt.s32.totalorder %s17, 3
      %p166 = pnand %p164, %p165
      %p167 = pneg %p166
      // Predicated region
      $region9: #{tpu_custom_call.1} parent=5 // pred_check
        _
      $region10: #{tpu_custom_call.1} parent=5 // pred_check_branch
        %169 = sbr.rel (%p166) target = $region12
      $region11: #{tpu_custom_call.1} parent=5 // pred_region
        %s170 = ssub.s32 %s17, 1
        // Predicated region
        $region13: #{tpu_custom_call.1} parent=11 // pred_check
          %p171 = pneg %p81
        $region14: #{tpu_custom_call.1} parent=11 // pred_check_branch
          %173 = sbr.rel (%p171) target = $region16
        $region15: #{tpu_custom_call.1} parent=11 // pred_region
          %s175 = ssub.s32 128, 128
          %176 = vsyncadd [#allocation6], %s175
          %s177 = smul.addr %s26, 128
          %s178 = scalar_lea.hbm %s1, %s177
          %s180 = sshll.u32 [#allocation5], 4
          %s181 = int_to_ptr.vmem [resolvable:$true] %s180
          %183 = dma.hbm_to_vmem [thread:$0]  %s178, 128, %s181, [#allocation6]
        $region16: #{tpu_custom_call.1} parent=11 // pred_fallthru
          _
        // Predicated region
        $region17: #{tpu_custom_call.1} parent=11 // pred_check
          %p184 = pneg %p107
        $region18: #{tpu_custom_call.1} parent=11 // pred_check_branch
          %186 = sbr.rel (%p184) target = $region20
        $region19: #{tpu_custom_call.1} parent=11 // pred_region
          %p187 = scmp.lt.s32.totalorder %s26, 0
          %s188 = scalar_select %p187, %s26, 0
          %s189 = smul.addr %s188, 8
          %s190 = scalar_lea.vmem %s2, %s189
        $region20: #{tpu_custom_call.1} parent=11 // pred_fallthru
          _
        // Predicated region
        $region21: #{tpu_custom_call.1} parent=11 // pred_check
          %p191 = pneg %p128
        $region22: #{tpu_custom_call.1} parent=11 // pred_check_branch
          %193 = sbr.rel (%p191) target = $region24
        $region23: #{tpu_custom_call.1} parent=11 // pred_region
          _
        $region24: #{tpu_custom_call.1} parent=11 // pred_fallthru
          _
      $region12: #{tpu_custom_call.1} parent=5 // pred_fallthru
        _
      %p194 = scmp.lt.s32.totalorder %s17, 2
      // Predicated region
      $region25: #{tpu_custom_call.1} parent=5 // pred_check
        %p195 = pneg %p194
      $region26: #{tpu_custom_call.1} parent=5 // pred_check_branch
        %197 = sbr.rel (%p195) target = $region28
      $region27: #{tpu_custom_call.1} parent=5 // pred_region
        // Predicated region
        $region29: #{tpu_custom_call.1} parent=27 // pred_check
          %p198 = pneg %p49
        $region30: #{tpu_custom_call.1} parent=27 // pred_check_branch
          %200 = sbr.rel (%p198) target = $region32
        $region31: #{tpu_custom_call.1} parent=27 // pred_region
          %s201 = sand.u32 %s39, 1
          %s202 = scalar_lea.sflag [#allocation3], %s201
          %s203 = sand.u32 %s39, 1
          %s204 = smul.addr %s203, 8
          %s205 = scalar_lea.vmem [#allocation2], %s204
          %s207 = ssub.s32 128, 128
          %208 = vsyncadd %s202, %s207
          %s209 = smul.addr %s25, 2
          %s210 = smul.addr %s209, 64
          %s211 = scalar_lea.hbm %s0, %s210
          %s213 = sshll.u32 %s205, 4
          %s214 = int_to_ptr.vmem [resolvable:$true] %s213
          %216 = dma.hbm_to_vmem [thread:$0]  %s211, 128, %s214, %s202
        $region32: #{tpu_custom_call.1} parent=27 // pred_fallthru
          _
      $region28: #{tpu_custom_call.1} parent=5 // pred_fallthru
        _
      %p217 = scmp.le.s32.totalorder 1, %s17
      %p218 = scmp.lt.s32.totalorder %s17, 3
      %p219 = pnand %p217, %p218
      %p220 = pneg %p219
      // Predicated region
      $region33: #{tpu_custom_call.1} parent=5 // pred_check
        _
      $region34: #{tpu_custom_call.1} parent=5 // pred_check_branch
        %222 = sbr.rel (%p219) target = $region36
      $region35: #{tpu_custom_call.1} parent=5 // pred_region
        %s223 = ssub.s32 %s17, 1
        %s224 = sand.u32 %s42, 1
        %s225 = scalar_lea.sflag [#allocation3], %s224
        %s226 = sand.u32 %s42, 1
        %s227 = smul.addr %s226, 8
        %s228 = scalar_lea.vmem [#allocation2], %s227
        // Predicated region
        $region37: #{tpu_custom_call.1} parent=35 // pred_check
          %p229 = pneg %p55
        $region38: #{tpu_custom_call.1} parent=35 // pred_check_branch
          %231 = sbr.rel (%p229) target = $region40
        $region39: #{tpu_custom_call.1} parent=35 // pred_region
          %232 = dma.done %s225, 128
        $region40: #{tpu_custom_call.1} parent=35 // pred_fallthru
          _
        // Predicated region
        $region41: #{tpu_custom_call.1} parent=35 // pred_check
          %p233 = pneg %p81
        $region42: #{tpu_custom_call.1} parent=35 // pred_check_branch
          %235 = sbr.rel (%p233) target = $region44
        $region43: #{tpu_custom_call.1} parent=35 // pred_region
          %236 = dma.done [#allocation6], 128
        $region44: #{tpu_custom_call.1} parent=35 // pred_fallthru
          _
        %s237 = sand.u32 %s42, 1
        %s238 = scalar_lea.sflag [#allocation3], %s237
        %s239 = sand.u32 %s42, 1
        %s240 = smul.addr %s239, 8
        %s241 = scalar_lea.vmem [#allocation2], %s240
        %p242 = pneg %p55
        %p243 = pneg %p52
        %p244 = pneg %p81
        %p245 = pneg %p78
        %p246 = scmp.lt.s32.totalorder %s26, 0
        %s247 = scalar_select %p246, %s26, 0
        %s248 = smul.addr %s247, 8
        %s249 = scalar_lea.vmem %s2, %s248
        %p250 = pneg %p107
        %p251 = pneg %p104
        %p252 = pneg %p128
        %p253 = pneg %p125
        %p254 = pneg %p156
        %p255 = pneg %p153
        %s256 = sand.u32 %s143, 1
        %s257 = scalar_lea.sflag [#allocation4], %s256
        %s258 = sand.u32 %s143, 1
        %s259 = smul.addr %s258, 16
        %s260 = scalar_lea.vmem [#allocation7], %s259
        %p261 = scmp.lt.s32.totalorder %s26, 0
        %s262 = scalar_select %p261, %s26, 0
        %s263 = smul.addr %s262, 8
        %s264 = scalar_lea.vmem %s2, %s263
        %v265 = vld [vmem:[%s228] sm:$0xff]
        %v267 = vcombine.high %v265, %v265
        %269 = vrot.lane.b32.xlu0 %v265, 17
        %v270 = vpop.permute.xlu0 %269
        %271 = vrot.lane.b32.xlu0 %v267, 17
        %v272 = vpop.permute.xlu0 %271
        %v273 = vlaneseq
        %v274 = vand.u32 %v273, 127
        %vm275 = vcmp.lt.s32.totalorder %v274, 17
        %v276 = vsel %vm275, %v270, %v272
        %v277 = vsel %vm275, %v272, %v270
        %v278 = vld [vmem:[%s3] sm:$0x3]
        %v280 = vlaneseq
        %v281 = vshrl.u32 %v280, 7
        %v282 = vsub.s32 0, %v281
        %v283 = vrot.slane %v278, %v282
        %v284 = vlaneseq
        %v285 = vshrl.u32 %v284, 7
        %v286 = vsub.s32 1, %v285
        %v287 = vrot.slane %v278, %v286
        %v290 = vmul.f32 %v277, %v283
        %v291 = vmul.f32 %v276, %v287
        %292 = vrot.lane.b32.xlu0 %v265, 16
        %v293 = vpop.permute.xlu0 %292
        %294 = vrot.lane.b32.xlu0 %v267, 16
        %v295 = vpop.permute.xlu0 %294
        %vm296 = vcmp.lt.s32.totalorder %v274, 16
        %v297 = vsel %vm296, %v293, %v295
        %v298 = vsel %vm296, %v295, %v293
        %s299 = scalar_lea.vmem %s3, 2
        %v300 = vld [vmem:[%s299] sm:$0x3]
        %v302 = vlaneseq
        %v303 = vshrl.u32 %v302, 7
        %v304 = vsub.s32 0, %v303
        %v305 = vrot.slane %v300, %v304
        %v306 = vlaneseq
        %v307 = vshrl.u32 %v306, 7
        %v308 = vsub.s32 1, %v307
        %v309 = vrot.slane %v300, %v308
        %v312 = vmul.f32 %v298, %v305
        %v313 = vmul.f32 %v297, %v309
        %314 = vrot.lane.b32.xlu0 %v265, 15
        %v315 = vpop.permute.xlu0 %314
        %316 = vrot.lane.b32.xlu0 %v267, 15
        %v317 = vpop.permute.xlu0 %316
        %vm318 = vcmp.lt.s32.totalorder %v274, 15
        %v319 = vsel %vm318, %v315, %v317
        %v320 = vsel %vm318, %v317, %v315
        %s321 = scalar_lea.vmem %s3, 4
        %v322 = vld [vmem:[%s321] sm:$0x3]
        %v324 = vlaneseq
        %v325 = vshrl.u32 %v324, 7
        %v326 = vsub.s32 0, %v325
        %v327 = vrot.slane %v322, %v326
        %v328 = vlaneseq
        %v329 = vshrl.u32 %v328, 7
        %v330 = vsub.s32 1, %v329
        %v331 = vrot.slane %v322, %v330
        %v334 = vmul.f32 %v320, %v327
        %v335 = vmul.f32 %v319, %v331
        %336 = vrot.lane.b32.xlu0 %v265, 1
        %v337 = vpop.permute.xlu0 %336
        %338 = vrot.lane.b32.xlu0 %v267, 1
        %v339 = vpop.permute.xlu0 %338
        %vm340 = vcmp.lt.s32.totalorder %v274, 1
        %v341 = vsel %vm340, %v337, %v339
        %v342 = vsel %vm340, %v339, %v337
        %s343 = scalar_lea.vmem %s3, 6
        %v344 = vld [vmem:[%s343] sm:$0x3]
        %v346 = vlaneseq
        %v347 = vshrl.u32 %v346, 7
        %v348 = vsub.s32 0, %v347
        %v349 = vrot.slane %v344, %v348
        %v350 = vlaneseq
        %v351 = vshrl.u32 %v350, 7
        %v352 = vsub.s32 1, %v351
        %v353 = vrot.slane %v344, %v352
        %v356 = vmul.f32 %v342, %v349
        %v357 = vmul.f32 %v341, %v353
        %358 = vrot.lane.b32.xlu0 %v265, 127
        %v359 = vpop.permute.xlu0 %358
        %360 = vrot.lane.b32.xlu0 %v267, 127
        %v361 = vpop.permute.xlu0 %360
        %vm362 = vcmp.lt.s32.totalorder %v274, 127
        %v363 = vsel %vm362, %v359, %v361
        %v364 = vsel %vm362, %v361, %v359
        %s365 = scalar_lea.vmem %s3, 10
        %v366 = vld [vmem:[%s365] sm:$0x3]
        %v368 = vlaneseq
        %v369 = vshrl.u32 %v368, 7
        %v370 = vsub.s32 0, %v369
        %v371 = vrot.slane %v366, %v370
        %v372 = vlaneseq
        %v373 = vshrl.u32 %v372, 7
        %v374 = vsub.s32 1, %v373
        %v375 = vrot.slane %v366, %v374
        %v378 = vmul.f32 %v363, %v371
        %v379 = vmul.f32 %v364, %v375
        %380 = vrot.lane.b32.xlu0 %v265, 113
        %v381 = vpop.permute.xlu0 %380
        %382 = vrot.lane.b32.xlu0 %v267, 113
        %v383 = vpop.permute.xlu0 %382
        %vm384 = vcmp.lt.s32.totalorder %v274, 113
        %v385 = vsel %vm384, %v381, %v383
        %v386 = vsel %vm384, %v383, %v381
        %s387 = scalar_lea.vmem %s3, 12
        %v388 = vld [vmem:[%s387] sm:$0x3]
        %v390 = vlaneseq
        %v391 = vshrl.u32 %v390, 7
        %v392 = vsub.s32 0, %v391
        %v393 = vrot.slane %v388, %v392
        %v394 = vlaneseq
        %v395 = vshrl.u32 %v394, 7
        %v396 = vsub.s32 1, %v395
        %v397 = vrot.slane %v388, %v396
        %v400 = vmul.f32 %v385, %v393
        %v401 = vmul.f32 %v386, %v397
        %402 = vrot.lane.b32.xlu0 %v265, 112
        %v403 = vpop.permute.xlu0 %402
        %404 = vrot.lane.b32.xlu0 %v267, 112
        %v405 = vpop.permute.xlu0 %404
        %vm406 = vcmp.lt.s32.totalorder %v274, 112
        %v407 = vsel %vm406, %v403, %v405
        %v408 = vsel %vm406, %v405, %v403
        %s409 = scalar_lea.vmem %s3, 14
        %v410 = vld [vmem:[%s409] sm:$0x3]
        %v412 = vlaneseq
        %v413 = vshrl.u32 %v412, 7
        %v414 = vsub.s32 0, %v413
        %v415 = vrot.slane %v410, %v414
        %v416 = vlaneseq
        %v417 = vshrl.u32 %v416, 7
        %v418 = vsub.s32 1, %v417
        %v419 = vrot.slane %v410, %v418
        %v422 = vmul.f32 %v407, %v415
        %v423 = vmul.f32 %v408, %v419
        %424 = vrot.lane.b32.xlu0 %v265, 111
        %v425 = vpop.permute.xlu0 %424
        %426 = vrot.lane.b32.xlu0 %v267, 111
        %v427 = vpop.permute.xlu0 %426
        %vm428 = vcmp.lt.s32.totalorder %v274, 111
        %v429 = vsel %vm428, %v425, %v427
        %v430 = vsel %vm428, %v427, %v425
        %s431 = scalar_lea.vmem %s3, 16
        %v432 = vld [vmem:[%s431] sm:$0x3]
        %v434 = vlaneseq
        %v435 = vshrl.u32 %v434, 7
        %v436 = vsub.s32 0, %v435
        %v437 = vrot.slane %v432, %v436
        %v438 = vlaneseq
        %v439 = vshrl.u32 %v438, 7
        %v440 = vsub.s32 1, %v439
        %v441 = vrot.slane %v432, %v440
        %v444 = vmul.f32 %v429, %v437
        %v445 = vmul.f32 %v430, %v441
        %v448 = vrot.slane %v312, 4
        %v449 = vrot.slane %v313, 4
        %v454 = vrot.slane %v356, 4
        %v455 = vrot.slane %v357, 4
        %v460 = vrot.slane %v378, 4
        %v461 = vrot.slane %v379, 4
        %v466 = vrot.slane %v422, 4
        %v467 = vrot.slane %v423, 4
        %vm470 = vcmask 1043456
        %v471 = vsel %vm470, %v290, %v448
        %v472 = vsel %vm470, %v291, %v449
        %v473 = vsel %vm470, %v334, %v454
        %v474 = vsel %vm470, %v335, %v455
        %v475 = vsel %vm470, %v265, %v460
        %v476 = vsel %vm470, %v267, %v461
        %v477 = vsel %vm470, %v400, %v466
        %v478 = vsel %vm470, %v401, %v467
        %v479 = vld [vmem:[#allocation5] sm:$0xff]
        %v480 = vld [vmem:[%s264] sm:$0xff]
        %482 = vset.pattern.permute.xlu0 0
        %483 = vperm.xlu0 %482, %v480
        %v484 = vpop.permute.xlu0 %483
        %vm486 = vcmask 293888
        %v488 = vsel %vm486, %v479, 0
        %v491 = vsel %vm470, %v444, 0
        %v494 = vsel %vm470, %v445, 0
        %496 = vmatprep.subr.mxu0 %v472
        %497 = vmatpush1.msra.mxu0 %v471
        %498 = vmatprep.subr.mxu0 %v474
        %499 = vmatpush1.msra.mxu0 %v473
        %500 = vmatprep.subr.mxu0 %v476
        %501 = vmatpush1.msra.mxu0 %v475
        %502 = vmatprep.subr.mxu0 %v478
        %503 = vmatpush1.msra.mxu0 %v477
        %504 = vmatprep.subr.mxu0 %v494
        %505 = vmatpush1.msra.mxu0 %v491
        %506 = vmatprep.subr.mxu0 0.0
        %507 = vmatpush1.msra.mxu0 0.0
        %508 = vmatprep.subr.mxu0 0.0
        %509 = vmatpush1.msra.mxu0 0.0
        %510 = vmatprep.subr.mxu0 0.0
        %511 = vmatpush1.msra.mxu0 0.0
        %512 = vmatprep.subr.mxu0 0.0
        %513 = vmatpush1.msra.mxu0 0.0
        %514 = vmatprep.subr.mxu0 0.0
        %515 = vmatpush1.msra.mxu0 0.0
        %516 = vmatprep.subr.mxu0 0.0
        %517 = vmatpush1.msra.mxu0 0.0
        %518 = vmatprep.subr.mxu0 0.0
        %519 = vmatpush1.msra.mxu0 0.0
        %520 = vmatprep.subr.mxu0 0.0
        %521 = vmatpush1.msra.mxu0 0.0
        %522 = vmatprep.subr.mxu0 0.0
        %523 = vmatpush1.msra.mxu0 0.0
        %524 = vmatprep.subr.mxu0 0.0
        %525 = vmatpush1.msra.mxu0 0.0
        %526 = vmatprep.subr.mxu0 0.0
        %527 = vmatpush1.msra.mxu0 0.0
        %528 = vmatprep.subr.mxu0 0.0
        %529 = vmatpush1.msra.mxu0 0.0
        %530 = vmatprep.subr.mxu0 0.0
        %531 = vmatpush1.msra.mxu0 0.0
        %532 = vmatprep.subr.mxu0 0.0
        %533 = vmatpush1.msra.mxu0 0.0
        %534 = vmatprep.subr.mxu0 0.0
        %535 = vmatpush1.msra.mxu0 0.0
        %536 = vmatprep.subr.mxu0 0.0
        %537 = vmatpush1.msra.mxu0 0.0
        %538 = vmatprep.subr.mxu0 0.0
        %539 = vmatpush1.msra.mxu0 0.0
        %540 = vmatprep.subr.mxu0 0.0
        %541 = vmatpush1.msra.mxu0 0.0
        %542 = vmatprep.subr.mxu0 0.0
        %543 = vmatpush1.msra.mxu0 0.0
        %544 = vmatprep.subr.mxu0 0.0
        %545 = vmatpush1.msra.mxu0 0.0
        %546 = vmatprep.subr.mxu0 0.0
        %547 = vmatpush1.msra.mxu0 0.0
        %548 = vmatprep.subr.mxu0 0.0
        %549 = vmatpush1.msra.mxu0 0.0
        %550 = vmatprep.subr.mxu0 0.0
        %551 = vmatpush1.msra.mxu0 0.0
        %552 = vmatprep.subr.mxu0 0.0
        %553 = vmatpush1.msra.mxu0 0.0
        %554 = vmatprep.subr.mxu0 0.0
        %555 = vmatpush1.msra.mxu0 0.0
        %556 = vmatprep.subr.mxu0 0.0
        %557 = vmatpush1.msra.mxu0 0.0
        %558 = vmatprep.subr.mxu0 0.0
        %559 = vmatpush1.msra.mxu0 0.0
        %560 = vmatprep.mubr.f32.mxu0 0.0
        %561 = vmatmul.mubr.f32.gmra.mrb[0].mxu0 %v488
        %v562 = vpop.f32.mrb[0].mxu0
        %v563 = vadd.f32 %v484, %v562
        %v564 = vpop.f32.mrb[0].mxu0
        %v565 = vadd.f32 %v484, %v564
        %566 = vdwg.mxu0
        %v567 = vxor.u32 %v563, 2147483648
        %v568 = vxor.u32 %v565, 2147483648
        %v569 = vmul.f32 %v567, 1.442695
        %v570 = vpow.pop %v569
        %v571 = vmul.f32 %v568, 1.442695
        %v572 = vpow.pop %v571
        %v573 = vadd.f32 %v570, 1.0
        %v574 = vadd.f32 %v572, 1.0
        %v575 = vrcp.pop %v573
        %v576 = vmul.f32 1.0, %v575
        %v577 = vrcp.pop %v574
        %v578 = vmul.f32 1.0, %v577
        %v579 = vmul.f32 %v563, %v576
        %v580 = vmul.f32 %v565, %v578
        %581 = vst [vmem:[%s260] sm:$0xff] %v579
        %582 = vst [vmem:[%s260 + $0x8] sm:$0xff] %v580
        %s583 = sand.u32 %s143, 1
        %s584 = scalar_lea.sflag [#allocation4], %s583
        %s585 = sand.u32 %s143, 1
        %s586 = smul.addr %s585, 16
        %s587 = scalar_lea.vmem [#allocation7], %s586
        // Predicated region
        $region45: #{tpu_custom_call.1} parent=35 // pred_check
          %p588 = pneg %p153
        $region46: #{tpu_custom_call.1} parent=35 // pred_check_branch
          %590 = sbr.rel (%p588) target = $region48
        $region47: #{tpu_custom_call.1} parent=35 // pred_region
          %s592 = ssub.s32 256, 256
          %593 = vsyncadd %s584, %s592
          %s594 = smul.addr %s26, 2
          %s595 = smul.addr %s27, 2
          %s596 = sadd.s32 %s594, %s595
          %s597 = smul.addr %s596, 128
          %s598 = scalar_lea.hbm %s4, %s597
          %s600 = sshll.u32 %s587, 4
          %s601 = int_to_ptr.vmem [resolvable:$true] %s600
          %603 = dma.vmem_to_hbm [thread:$0]  %s601, 256, %s598, %s584
        $region48: #{tpu_custom_call.1} parent=35 // pred_fallthru
          _
      $region36: #{tpu_custom_call.1} parent=5 // pred_fallthru
        _
      %p604 = scmp.le.s32.totalorder 2, %s17
      // Predicated region
      $region49: #{tpu_custom_call.1} parent=5 // pred_check
        %p605 = pneg %p604
      $region50: #{tpu_custom_call.1} parent=5 // pred_check_branch
        %607 = sbr.rel (%p605) target = $region52
      $region51: #{tpu_custom_call.1} parent=5 // pred_region
        %s608 = ssub.s32 %s17, 2
        // Predicated region
        $region53: #{tpu_custom_call.1} parent=51 // pred_check
          %p609 = pneg %p159
        $region54: #{tpu_custom_call.1} parent=51 // pred_check_branch
          %611 = sbr.rel (%p609) target = $region56
        $region55: #{tpu_custom_call.1} parent=51 // pred_region
          %s612 = sand.u32 %s144, 1
          %s613 = scalar_lea.sflag [#allocation4], %s612
          %s614 = sand.u32 %s144, 1
          %s615 = smul.addr %s614, 16
          %s616 = scalar_lea.vmem [#allocation7], %s615
          %617 = dma.done %s613, 256
        $region56: #{tpu_custom_call.1} parent=51 // pred_fallthru
          _
      $region52: #{tpu_custom_call.1} parent=5 // pred_fallthru
        _
    $region6: #{tpu_custom_call.1} parent=1 // loop_footer
      %s21 = sadd.s32 1, %s17
    $region7: #{tpu_custom_call.1} parent=1 // loop_footer_branch
      %16 = sbr.rel target = $region3
    $region8: #{tpu_custom_call.1} parent=1 // loop_exit
      _
    %618 = vsyncpa [#allocation3], 1
    %s619 = scalar_lea.sflag [#allocation3], 1
    %620 = vsyncpa %s619, 1
    %621 = vsyncpa [#allocation6], 1
    %622 = vsyncpa [#allocation4], 1
    %s623 = scalar_lea.sflag [#allocation4], 1
    %624 = vsyncpa %s623, 1

</llo_original>
